<compile_context>
chip_gen: v7x
topology: tpu7x:2x2x1
jax: 0.10.0
libtpu: 0.0.40
codegen_flags: <defaults>
</compile_context>

<pallas_src>
import jax
import jax.numpy as jnp
from jax import lax
from jax.experimental import pallas as pl
from jax.experimental.pallas import tpu as pltpu


def _make_kernel(kernel_size, dilation, block_batch, has_downsample, compute_dtype):
    K = kernel_size
    pad = (K - 1) * dilation

    def causal_cols(x2d):
        """(C, T) -> (K*C, T): im2col rows for the causal dilated conv.

        Tap k (rows [k*C, (k+1)*C)) holds x[:, t - (pad - k*dilation)], with zeros
        where the time index is negative (== the causal left zero-padding that
        conv1d(padding=pad) + Chomp1d(pad) produces).
        """
        if K == 1:
            return x2d
        n_ch, t_len = x2d.shape
        t_idx = lax.broadcasted_iota(jnp.int32, (n_ch, t_len), 1)
        taps = []
        for k in range(K):
            s = pad - k * dilation
            if s == 0:
                taps.append(x2d)
            else:
                rolled = pltpu.roll(x2d, shift=s, axis=1)
                taps.append(jnp.where(t_idx < s, jnp.zeros_like(rolled), rolled))
        return jnp.concatenate(taps, axis=0)

    def kernel(x_ref, w1_ref, b1_ref, w2_ref, b2_ref, *rest):
        # x_ref  : (BB, C_in, T)
        # w1_ref : (C_mid, K*C_in)   fused tap-major conv1 weights
        # w2_ref : (C_out, K*C_mid)  fused tap-major conv2 weights
        # b*_ref : (C, 1)
        # wd_ref : (C_out, C_in), bd_ref: (C_out, 1)   (only if has_downsample)
        # out_ref: (BB, C_out, T)
        if has_downsample:
            wd_ref, bd_ref, out_ref = rest
        else:
            (out_ref,) = rest

        t_len = x_ref.shape[2]
        w1 = w1_ref[...]
        w2 = w2_ref[...]
        # Hoist bias broadcasts out of the per-batch loop (no CSE of broadcasts).
        b1b = jnp.broadcast_to(b1_ref[...], (w1.shape[0], t_len))
        b2b = jnp.broadcast_to(b2_ref[...], (w2.shape[0], t_len))
        if has_downsample:
            wd = wd_ref[...]
            bdb = jnp.broadcast_to(bd_ref[...], (w2.shape[0], t_len))

        for b in range(block_batch):
            x = x_ref[b]                                           # (C_in, T)

            # ---- conv1 (causal dilated, fused im2col matmul) + bias + ReLU ----
            h1 = jnp.dot(w1, causal_cols(x), preferred_element_type=jnp.float32)
            h1 = jnp.maximum(h1 + b1b, 0.0)                        # (C_mid, T) f32
            # TODO(synk): dropout1 / dropout2 are identity (inference / eval mode).

            # ---- conv2 (causal dilated, fused im2col matmul) + bias + ReLU ----
            h1c = h1.astype(compute_dtype)
            h2 = jnp.dot(w2, causal_cols(h1c), preferred_element_type=jnp.float32)
            h2 = jnp.maximum(h2 + b2b, 0.0)                        # (C_out, T) f32

            # ---- residual branch: 1x1 conv, or plain identity (no matmul) ----
            if has_downsample:
                res = jnp.dot(wd, x, preferred_element_type=jnp.float32) + bdb
            else:
                res = x.astype(jnp.float32)

            out_ref[b] = jnp.maximum(h2 + res, 0.0).astype(out_ref.dtype)

    return kernel


def tcn_residual_block(x_nct, params, *, kernel_size, dilation,
                       block_batch=8, compute_dtype=jnp.float32):
    """x_nct: (B, C_in, T) float32 (PyTorch Conv1d layout). Returns (B, C_out, T) f32.

    params: {"w1": (C_mid, C_in, K), "b1": (C_mid,), "w2": (C_out, C_mid, K),
             "b2": (C_out,), optionally "wd": (C_out, C_in, 1), "bd": (C_out,)}.
    """
    B, C_in, T = x_nct.shape
    K = kernel_size
    C_mid = params["w1"].shape[0]
    C_out = params["w2"].shape[0]
    has_downsample = params.get("wd", None) is not None

    # PyTorch conv1d weight (C_out, C_in, K) -> fused tap-major (C_out, K*C_in):
    # W[o, k*C_in + i] = w[o, i, k], matching causal_cols row ordering.
    w1f = jnp.transpose(params["w1"], (0, 2, 1)).reshape(C_mid, K * C_in).astype(compute_dtype)
    w2f = jnp.transpose(params["w2"], (0, 2, 1)).reshape(C_out, K * C_mid).astype(compute_dtype)
    b1 = params["b1"].reshape(C_mid, 1).astype(jnp.float32)
    b2 = params["b2"].reshape(C_out, 1).astype(jnp.float32)

    x = x_nct.astype(compute_dtype)          # NCT consumed directly, no transpose / pad.

    BB = min(B, block_batch)
    n_blocks = pl.cdiv(B, BB)
    B_pad = n_blocks * BB
    if B_pad != B:
        x = jnp.pad(x, ((0, B_pad - B), (0, 0), (0, 0)))

    inputs = [x, w1f, b1, w2f, b2]
    in_specs = [
        pl.BlockSpec((BB, C_in, T), lambda i: (i, 0, 0)),
        pl.BlockSpec((C_mid, K * C_in), lambda i: (0, 0)),
        pl.BlockSpec((C_mid, 1), lambda i: (0, 0)),
        pl.BlockSpec((C_out, K * C_mid), lambda i: (0, 0)),
        pl.BlockSpec((C_out, 1), lambda i: (0, 0)),
    ]
    if has_downsample:
        wdf = params["wd"][:, :, 0].astype(compute_dtype)          # (C_out, C_in)
        bd = params["bd"].reshape(C_out, 1).astype(jnp.float32)
        inputs += [wdf, bd]
        in_specs += [
            pl.BlockSpec((C_out, C_in), lambda i: (0, 0)),
            pl.BlockSpec((C_out, 1), lambda i: (0, 0)),
        ]

    kernel = _make_kernel(K, dilation, BB, has_downsample, compute_dtype)

    out = pl.pallas_call(
        kernel,
        out_shape=jax.ShapeDtypeStruct((B_pad, C_out, T), jnp.float32),
        grid_spec=pltpu.PrefetchScalarGridSpec(
            num_scalar_prefetch=0,
            grid=(n_blocks,),
            in_specs=in_specs,
            out_specs=pl.BlockSpec((BB, C_out, T), lambda i: (i, 0, 0)),
        ),
        compiler_params=pltpu.CompilerParams(dimension_semantics=("parallel",)),
    )(*inputs)

    return out[:B]


# ----------------- pure-JAX reference (mirrors the PyTorch forward) -----------------
def _ref_conv1d(x, w, b, dilation, padding):
    # x: (B, C_in, T), w: (C_out, C_in, K)
    y = lax.conv_general_dilated(
        x, w, window_strides=(1,), padding=[(padding, padding)],
        rhs_dilation=(dilation,), dimension_numbers=("NCH", "OIH", "NCH"))
    return y + b[None, :, None]


def tcn_residual_block_ref(x, params, *, kernel_size, dilation):
    pad = (kernel_size - 1) * dilation
    h = _ref_conv1d(x, params["w1"], params["b1"], dilation, pad)
    if pad > 0:
        h = h[:, :, :-pad]
    h = jnp.maximum(h, 0.0)
    h = _ref_conv1d(h, params["w2"], params["b2"], dilation, pad)
    if pad > 0:
        h = h[:, :, :-pad]
    h = jnp.maximum(h, 0.0)
    if params.get("wd", None) is not None:
        res = _ref_conv1d(x, params["wd"], params["bd"], 1, 0)
    else:
        res = x
    return jnp.maximum(h + res, 0.0)


if __name__ == "__main__":
    key = jax.random.PRNGKey(0)

    # --- Case 1: n_inputs != n_outputs -> 1x1 downsample on the residual path ---
    B, C_in, C_out, T = 2, 4, 8, 16
    K, dilation = 3, 2
    k_x, k_w1, k_b1, k_w2, k_b2, k_wd, k_bd, key = jax.random.split(key, 8)
    x = jax.random.normal(k_x, (B, C_in, T), jnp.float32)
    params = {
        "w1": 0.3 * jax.random.normal(k_w1, (C_out, C_in, K), jnp.float32),
        "b1": 0.1 * jax.random.normal(k_b1, (C_out,), jnp.float32),
        "w2": 0.3 * jax.random.normal(k_w2, (C_out, C_out, K), jnp.float32),
        "b2": 0.1 * jax.random.normal(k_b2, (C_out,), jnp.float32),
        "wd": 0.3 * jax.random.normal(k_wd, (C_out, C_in, 1), jnp.float32),
        "bd": 0.1 * jax.random.normal(k_bd, (C_out,), jnp.float32),
    }
    out = tcn_residual_block(x, params, kernel_size=K, dilation=dilation)
    out = jax.block_until_ready(out)
    ref = tcn_residual_block_ref(x, params, kernel_size=K, dilation=dilation)
    assert out.shape == (B, C_out, T), out.shape
    assert jnp.allclose(out, ref, atol=1e-5, rtol=1e-5), float(jnp.max(jnp.abs(out - ref)))

    # --- Case 2: n_inputs == n_outputs -> identity residual (no downsample matmul) ---
    B2, C2, T2 = 3, 8, 16
    K2, d2 = 2, 1
    k_x2, k_w1b, k_b1b, k_w2b, k_b2b, key = jax.random.split(key, 6)
    x2 = jax.random.normal(k_x2, (B2, C2, T2), jnp.float32)
    params2 = {
        "w1": 0.3 * jax.random.normal(k_w1b, (C2, C2, K2), jnp.float32),
        "b1": 0.1 * jax.random.normal(k_b1b, (C2,), jnp.float32),
        "w2": 0.3 * jax.random.normal(k_w2b, (C2, C2, K2), jnp.float32),
        "b2": 0.1 * jax.random.normal(k_b2b, (C2,), jnp.float32),
    }
    out2 = tcn_residual_block(x2, params2, kernel_size=K2, dilation=d2)
    out2 = jax.block_until_ready(out2)
    ref2 = tcn_residual_block_ref(x2, params2, kernel_size=K2, dilation=d2)
    assert out2.shape == (B2, C2, T2), out2.shape
    assert jnp.allclose(out2, ref2, atol=1e-5, rtol=1e-5), float(jnp.max(jnp.abs(out2 - ref2)))

    print("KERNEL_OK")
</pallas_src>

<mosaic_0001>
module attributes {stable_mosaic.version = 11 : i64} {
  func.func @kernel(%arg0: i32, %arg1: memref<2x4x16xf32, #tpu.memory_space<vmem>>, %arg2: memref<8x12xf32, #tpu.memory_space<vmem>>, %arg3: memref<8x1xf32, #tpu.memory_space<vmem>>, %arg4: memref<8x24xf32, #tpu.memory_space<vmem>>, %arg5: memref<8x1xf32, #tpu.memory_space<vmem>>, %arg6: memref<8x4xf32, #tpu.memory_space<vmem>>, %arg7: memref<8x1xf32, #tpu.memory_space<vmem>>, %arg8: memref<2x8x16xf32, #tpu.memory_space<vmem>>) attributes {dimension_semantics = [#tpu.dimension_semantics<parallel>], iteration_bounds = array<i64: 1>, scalar_prefetch = 0 : i64, scratch_operands = 0 : i64, tpu.core_type = #tpu.core_type<tc>, window_params = [{transform_indices = @transform_0, window_bounds = array<i64: 2, 4, 16>}, {pipeline_mode = #tpu.pipeline_mode<synchronous>, transform_indices = @transform_1, window_bounds = array<i64: 8, 12>}, {pipeline_mode = #tpu.pipeline_mode<synchronous>, transform_indices = @transform_2, window_bounds = array<i64: 8, 1>}, {pipeline_mode = #tpu.pipeline_mode<synchronous>, transform_indices = @transform_3, window_bounds = array<i64: 8, 24>}, {pipeline_mode = #tpu.pipeline_mode<synchronous>, transform_indices = @transform_4, window_bounds = array<i64: 8, 1>}, {pipeline_mode = #tpu.pipeline_mode<synchronous>, transform_indices = @transform_5, window_bounds = array<i64: 8, 4>}, {pipeline_mode = #tpu.pipeline_mode<synchronous>, transform_indices = @transform_6, window_bounds = array<i64: 8, 1>}, {transform_indices = @transform_7, window_bounds = array<i64: 2, 8, 16>}]} {
    %c0 = arith.constant 0 : index
    %c0_0 = arith.constant 0 : index
    %0 = vector.load %arg2[%c0, %c0_0] : memref<8x12xf32, #tpu.memory_space<vmem>>, vector<8x12xf32>
    %c0_1 = arith.constant 0 : index
    %c0_2 = arith.constant 0 : index
    %1 = vector.load %arg4[%c0_1, %c0_2] : memref<8x24xf32, #tpu.memory_space<vmem>>, vector<8x24xf32>
    %c0_3 = arith.constant 0 : index
    %c0_4 = arith.constant 0 : index
    %2 = vector.load %arg3[%c0_3, %c0_4] : memref<8x1xf32, #tpu.memory_space<vmem>>, vector<8x1xf32>
    %3 = vector.shape_cast %2 : vector<8x1xf32> to vector<8x1xf32>
    %4 = vector.broadcast %3 : vector<8x1xf32> to vector<8x16xf32>
    %c0_5 = arith.constant 0 : index
    %c0_6 = arith.constant 0 : index
    %5 = vector.load %arg5[%c0_5, %c0_6] : memref<8x1xf32, #tpu.memory_space<vmem>>, vector<8x1xf32>
    %6 = vector.shape_cast %5 : vector<8x1xf32> to vector<8x1xf32>
    %7 = vector.broadcast %6 : vector<8x1xf32> to vector<8x16xf32>
    %c0_7 = arith.constant 0 : index
    %c0_8 = arith.constant 0 : index
    %8 = vector.load %arg6[%c0_7, %c0_8] : memref<8x4xf32, #tpu.memory_space<vmem>>, vector<8x4xf32>
    %c0_9 = arith.constant 0 : index
    %c0_10 = arith.constant 0 : index
    %9 = vector.load %arg7[%c0_9, %c0_10] : memref<8x1xf32, #tpu.memory_space<vmem>>, vector<8x1xf32>
    %10 = vector.shape_cast %9 : vector<8x1xf32> to vector<8x1xf32>
    %11 = vector.broadcast %10 : vector<8x1xf32> to vector<8x16xf32>
    %c0_11 = arith.constant 0 : index
    %c0_12 = arith.constant 0 : index
    %c0_13 = arith.constant 0 : index
    %12 = vector.load %arg1[%c0_11, %c0_12, %c0_13] : memref<2x4x16xf32, #tpu.memory_space<vmem>>, vector<1x4x16xf32>
    %13 = vector.shape_cast %12 : vector<1x4x16xf32> to vector<4x16xf32>
    %14 = tpu.iota {dimensions = array<i32: 1>} : vector<4x16xi32>
    %c4_i32 = arith.constant 4 : i32
    %15 = tpu.dynamic_rotate %13 by %c4_i32 dim 1 : vector<4x16xf32>, i32 -> vector<4x16xf32>
    %c4_i32_14 = arith.constant 4 : i32
    %16 = vector.broadcast %c4_i32_14 : i32 to vector<4x16xi32>
    %17 = arith.cmpi slt, %14, %16 : vector<4x16xi32>
    %cst = arith.constant 0.000000e+00 : f32
    %18 = vector.broadcast %cst : f32 to vector<4x16xf32>
    %19 = arith.select %17, %18, %15 : vector<4x16xi1>, vector<4x16xf32>
    %c2_i32 = arith.constant 2 : i32
    %20 = tpu.dynamic_rotate %13 by %c2_i32 dim 1 : vector<4x16xf32>, i32 -> vector<4x16xf32>
    %c2_i32_15 = arith.constant 2 : i32
    %21 = vector.broadcast %c2_i32_15 : i32 to vector<4x16xi32>
    %22 = arith.cmpi slt, %14, %21 : vector<4x16xi32>
    %cst_16 = arith.constant 0.000000e+00 : f32
    %23 = vector.broadcast %cst_16 : f32 to vector<4x16xf32>
    %24 = arith.select %22, %23, %20 : vector<4x16xi1>, vector<4x16xf32>
    %25 = tpu.concatenate %19, %24, %13 in 0 : vector<4x16xf32>, vector<4x16xf32>, vector<4x16xf32> -> vector<12x16xf32>
    %cst_17 = arith.constant dense<0.000000e+00> : vector<8x16xf32>
    %26 = tpu.matmul %0, %25, %cst_17 {dimension_numbers = #tpu.dot_dimension_numbers<[1], [0], [0], [1], [0, 0, 1, 1], [], []>} : vector<8x12xf32>, vector<12x16xf32>, vector<8x16xf32> -> vector<8x16xf32>
    %27 = arith.addf %26, %4 : vector<8x16xf32>
    %cst_18 = arith.constant 0.000000e+00 : f32
    %28 = vector.broadcast %cst_18 : f32 to vector<8x16xf32>
    %29 = arith.maximumf %27, %28 : vector<8x16xf32>
    %30 = tpu.iota {dimensions = array<i32: 1>} : vector<8x16xi32>
    %c4_i32_19 = arith.constant 4 : i32
    %31 = tpu.dynamic_rotate %29 by %c4_i32_19 dim 1 : vector<8x16xf32>, i32 -> vector<8x16xf32>
    %c4_i32_20 = arith.constant 4 : i32
    %32 = vector.broadcast %c4_i32_20 : i32 to vector<8x16xi32>
    %33 = arith.cmpi slt, %30, %32 : vector<8x16xi32>
    %cst_21 = arith.constant 0.000000e+00 : f32
    %34 = vector.broadcast %cst_21 : f32 to vector<8x16xf32>
    %35 = arith.select %33, %34, %31 : vector<8x16xi1>, vector<8x16xf32>
    %c2_i32_22 = arith.constant 2 : i32
    %36 = tpu.dynamic_rotate %29 by %c2_i32_22 dim 1 : vector<8x16xf32>, i32 -> vector<8x16xf32>
    %c2_i32_23 = arith.constant 2 : i32
    %37 = vector.broadcast %c2_i32_23 : i32 to vector<8x16xi32>
    %38 = arith.cmpi slt, %30, %37 : vector<8x16xi32>
    %cst_24 = arith.constant 0.000000e+00 : f32
    %39 = vector.broadcast %cst_24 : f32 to vector<8x16xf32>
    %40 = arith.select %38, %39, %36 : vector<8x16xi1>, vector<8x16xf32>
    %41 = tpu.concatenate %35, %40, %29 in 0 : vector<8x16xf32>, vector<8x16xf32>, vector<8x16xf32> -> vector<24x16xf32>
    %cst_25 = arith.constant dense<0.000000e+00> : vector<8x16xf32>
    %42 = tpu.matmul %1, %41, %cst_25 {dimension_numbers = #tpu.dot_dimension_numbers<[1], [0], [0], [1], [0, 0, 1, 1], [], []>} : vector<8x24xf32>, vector<24x16xf32>, vector<8x16xf32> -> vector<8x16xf32>
    %43 = arith.addf %42, %7 : vector<8x16xf32>
    %cst_26 = arith.constant 0.000000e+00 : f32
    %44 = vector.broadcast %cst_26 : f32 to vector<8x16xf32>
    %45 = arith.maximumf %43, %44 : vector<8x16xf32>
    %cst_27 = arith.constant dense<0.000000e+00> : vector<8x16xf32>
    %46 = tpu.matmul %8, %13, %cst_27 {dimension_numbers = #tpu.dot_dimension_numbers<[1], [0], [0], [1], [0, 0, 1, 1], [], []>} : vector<8x4xf32>, vector<4x16xf32>, vector<8x16xf32> -> vector<8x16xf32>
    %47 = arith.addf %46, %11 : vector<8x16xf32>
    %48 = arith.addf %45, %47 : vector<8x16xf32>
    %cst_28 = arith.constant 0.000000e+00 : f32
    %49 = vector.broadcast %cst_28 : f32 to vector<8x16xf32>
    %50 = arith.maximumf %48, %49 : vector<8x16xf32>
    %c0_29 = arith.constant 0 : index
    %c0_30 = arith.constant 0 : index
    %c0_31 = arith.constant 0 : index
    %51 = vector.load %arg8[%c0_29, %c0_30, %c0_31] : memref<2x8x16xf32, #tpu.memory_space<vmem>>, vector<1x8x16xf32>
    %52 = vector.shape_cast %51 : vector<1x8x16xf32> to vector<8x16xf32>
    %53 = vector.shape_cast %50 : vector<8x16xf32> to vector<1x8x16xf32>
    tpu.vector_store %arg8[%c0_29, %c0_30, %c0_31], %53 {strides = array<i32>} : memref<2x8x16xf32, #tpu.memory_space<vmem>>, vector<1x8x16xf32>,
    %c1 = arith.constant 1 : index
    %c0_32 = arith.constant 0 : index
    %c0_33 = arith.constant 0 : index
    %54 = vector.load %arg1[%c1, %c0_32, %c0_33] : memref<2x4x16xf32, #tpu.memory_space<vmem>>, vector<1x4x16xf32>
    %55 = vector.shape_cast %54 : vector<1x4x16xf32> to vector<4x16xf32>
    %56 = tpu.iota {dimensions = array<i32: 1>} : vector<4x16xi32>
    %c4_i32_34 = arith.constant 4 : i32
    %57 = tpu.dynamic_rotate %55 by %c4_i32_34 dim 1 : vector<4x16xf32>, i32 -> vector<4x16xf32>
    %c4_i32_35 = arith.constant 4 : i32
    %58 = vector.broadcast %c4_i32_35 : i32 to vector<4x16xi32>
    %59 = arith.cmpi slt, %56, %58 : vector<4x16xi32>
    %cst_36 = arith.constant 0.000000e+00 : f32
    %60 = vector.broadcast %cst_36 : f32 to vector<4x16xf32>
    %61 = arith.select %59, %60, %57 : vector<4x16xi1>, vector<4x16xf32>
    %c2_i32_37 = arith.constant 2 : i32
    %62 = tpu.dynamic_rotate %55 by %c2_i32_37 dim 1 : vector<4x16xf32>, i32 -> vector<4x16xf32>
    %c2_i32_38 = arith.constant 2 : i32
    %63 = vector.broadcast %c2_i32_38 : i32 to vector<4x16xi32>
    %64 = arith.cmpi slt, %56, %63 : vector<4x16xi32>
    %cst_39 = arith.constant 0.000000e+00 : f32
    %65 = vector.broadcast %cst_39 : f32 to vector<4x16xf32>
    %66 = arith.select %64, %65, %62 : vector<4x16xi1>, vector<4x16xf32>
    %67 = tpu.concatenate %61, %66, %55 in 0 : vector<4x16xf32>, vector<4x16xf32>, vector<4x16xf32> -> vector<12x16xf32>
    %cst_40 = arith.constant dense<0.000000e+00> : vector<8x16xf32>
    %68 = tpu.matmul %0, %67, %cst_40 {dimension_numbers = #tpu.dot_dimension_numbers<[1], [0], [0], [1], [0, 0, 1, 1], [], []>} : vector<8x12xf32>, vector<12x16xf32>, vector<8x16xf32> -> vector<8x16xf32>
    %69 = arith.addf %68, %4 : vector<8x16xf32>
    %cst_41 = arith.constant 0.000000e+00 : f32
    %70 = vector.broadcast %cst_41 : f32 to vector<8x16xf32>
    %71 = arith.maximumf %69, %70 : vector<8x16xf32>
    %72 = tpu.iota {dimensions = array<i32: 1>} : vector<8x16xi32>
    %c4_i32_42 = arith.constant 4 : i32
    %73 = tpu.dynamic_rotate %71 by %c4_i32_42 dim 1 : vector<8x16xf32>, i32 -> vector<8x16xf32>
    %c4_i32_43 = arith.constant 4 : i32
    %74 = vector.broadcast %c4_i32_43 : i32 to vector<8x16xi32>
    %75 = arith.cmpi slt, %72, %74 : vector<8x16xi32>
    %cst_44 = arith.constant 0.000000e+00 : f32
    %76 = vector.broadcast %cst_44 : f32 to vector<8x16xf32>
    %77 = arith.select %75, %76, %73 : vector<8x16xi1>, vector<8x16xf32>
    %c2_i32_45 = arith.constant 2 : i32
    %78 = tpu.dynamic_rotate %71 by %c2_i32_45 dim 1 : vector<8x16xf32>, i32 -> vector<8x16xf32>
    %c2_i32_46 = arith.constant 2 : i32
    %79 = vector.broadcast %c2_i32_46 : i32 to vector<8x16xi32>
    %80 = arith.cmpi slt, %72, %79 : vector<8x16xi32>
    %cst_47 = arith.constant 0.000000e+00 : f32
    %81 = vector.broadcast %cst_47 : f32 to vector<8x16xf32>
    %82 = arith.select %80, %81, %78 : vector<8x16xi1>, vector<8x16xf32>
    %83 = tpu.concatenate %77, %82, %71 in 0 : vector<8x16xf32>, vector<8x16xf32>, vector<8x16xf32> -> vector<24x16xf32>
    %cst_48 = arith.constant dense<0.000000e+00> : vector<8x16xf32>
    %84 = tpu.matmul %1, %83, %cst_48 {dimension_numbers = #tpu.dot_dimension_numbers<[1], [0], [0], [1], [0, 0, 1, 1], [], []>} : vector<8x24xf32>, vector<24x16xf32>, vector<8x16xf32> -> vector<8x16xf32>
    %85 = arith.addf %84, %7 : vector<8x16xf32>
    %cst_49 = arith.constant 0.000000e+00 : f32
    %86 = vector.broadcast %cst_49 : f32 to vector<8x16xf32>
    %87 = arith.maximumf %85, %86 : vector<8x16xf32>
    %cst_50 = arith.constant dense<0.000000e+00> : vector<8x16xf32>
    %88 = tpu.matmul %8, %55, %cst_50 {dimension_numbers = #tpu.dot_dimension_numbers<[1], [0], [0], [1], [0, 0, 1, 1], [], []>} : vector<8x4xf32>, vector<4x16xf32>, vector<8x16xf32> -> vector<8x16xf32>
    %89 = arith.addf %88, %11 : vector<8x16xf32>
    %90 = arith.addf %87, %89 : vector<8x16xf32>
    %cst_51 = arith.constant 0.000000e+00 : f32
    %91 = vector.broadcast %cst_51 : f32 to vector<8x16xf32>
    %92 = arith.maximumf %90, %91 : vector<8x16xf32>
    %c1_52 = arith.constant 1 : index
    %c0_53 = arith.constant 0 : index
    %c0_54 = arith.constant 0 : index
    %93 = vector.load %arg8[%c1_52, %c0_53, %c0_54] : memref<2x8x16xf32, #tpu.memory_space<vmem>>, vector<1x8x16xf32>
    %94 = vector.shape_cast %93 : vector<1x8x16xf32> to vector<8x16xf32>
    %95 = vector.shape_cast %92 : vector<8x16xf32> to vector<1x8x16xf32>
    tpu.vector_store %arg8[%c1_52, %c0_53, %c0_54], %95 {strides = array<i32>} : memref<2x8x16xf32, #tpu.memory_space<vmem>>, vector<1x8x16xf32>,
    return
  }
  func.func @transform_0(%arg0: i32) -> (i32, i32, i32) {
    %c0_i32 = arith.constant 0 : i32
    %c0_i32_0 = arith.constant 0 : i32
    %c0_i32_1 = arith.constant 0 : i32
    return %arg0, %c0_i32, %c0_i32_0 : i32, i32, i32
  }
  func.func @transform_1(%arg0: i32) -> (i32, i32) {
    %c0_i32 = arith.constant 0 : i32
    %c0_i32_0 = arith.constant 0 : i32
    %c0_i32_1 = arith.constant 0 : i32
    return %c0_i32, %c0_i32_0 : i32, i32
  }
  func.func @transform_2(%arg0: i32) -> (i32, i32) {
    %c0_i32 = arith.constant 0 : i32
    %c0_i32_0 = arith.constant 0 : i32
    %c0_i32_1 = arith.constant 0 : i32
    return %c0_i32, %c0_i32_0 : i32, i32
  }
  func.func @transform_3(%arg0: i32) -> (i32, i32) {
    %c0_i32 = arith.constant 0 : i32
    %c0_i32_0 = arith.constant 0 : i32
    %c0_i32_1 = arith.constant 0 : i32
    return %c0_i32, %c0_i32_0 : i32, i32
  }
  func.func @transform_4(%arg0: i32) -> (i32, i32) {
    %c0_i32 = arith.constant 0 : i32
    %c0_i32_0 = arith.constant 0 : i32
    %c0_i32_1 = arith.constant 0 : i32
    return %c0_i32, %c0_i32_0 : i32, i32
  }
  func.func @transform_5(%arg0: i32) -> (i32, i32) {
    %c0_i32 = arith.constant 0 : i32
    %c0_i32_0 = arith.constant 0 : i32
    %c0_i32_1 = arith.constant 0 : i32
    return %c0_i32, %c0_i32_0 : i32, i32
  }
  func.func @transform_6(%arg0: i32) -> (i32, i32) {
    %c0_i32 = arith.constant 0 : i32
    %c0_i32_0 = arith.constant 0 : i32
    %c0_i32_1 = arith.constant 0 : i32
    return %c0_i32, %c0_i32_0 : i32, i32
  }
  func.func @transform_7(%arg0: i32) -> (i32, i32, i32) {
    %c0_i32 = arith.constant 0 : i32
    %c0_i32_0 = arith.constant 0 : i32
    %c0_i32_1 = arith.constant 0 : i32
    return %arg0, %c0_i32, %c0_i32_0 : i32, i32, i32
  }
}

</mosaic_0001>

<llo_original>
// kernel: tpu_custom_call.1
$region0: #{tpu_custom_call.1}
  #allocation0 [shape = 'u32[]', space=smem, size = 0x4, offset = 0x4, fixed_abs, tag = 'smem constant byte address 0x4 - core index']
  #allocation1 [shape = 'u32[144,128]{1,0:T(1,128)}', space=vmem, size = 0x12000, scoped, tag = 'internal scratch']
  %s0 = inlined_call_operand.vmem [shape: f32[2,4,16], index: 0, kind: input, shape index: {}]
  %s1 = inlined_call_operand.vmem [shape: f32[8,12], index: 1, kind: input, shape index: {}]
  %s2 = inlined_call_operand.vmem [shape: f32[8,1], index: 2, kind: input, shape index: {}]
  %s3 = inlined_call_operand.vmem [shape: f32[8,24], index: 3, kind: input, shape index: {}]
  %s4 = inlined_call_operand.vmem [shape: f32[8,1], index: 4, kind: input, shape index: {}]
  %s5 = inlined_call_operand.vmem [shape: f32[8,4], index: 5, kind: input, shape index: {}]
  %s6 = inlined_call_operand.vmem [shape: f32[8,1], index: 6, kind: input, shape index: {}]
  %s7 = inlined_call_operand.hbm [shape: f32[2,8,16], index: 7, kind: output, shape index: {}]
  %s8 = sld [smem:[#allocation0]]
  $region38: #{tpu_custom_call.1} parent=0
    _
  %s10 = ssub.s32 1, %s8
  %s11 = scalar_select 0, %s10, %s8
  $region1: #{tpu_custom_call.1} parent=0
    #allocation2 [shape = 'u8[8192]{0}', space=vmem, size = 0x2000, scoped, tag = 'output window, operand 0, single buffered']
    #allocation3 [shape = 's32[1]{0}', space=sflag, size = 0x4, scoped, tag = 'scoped memory for tpu_custom_call.1']
    %12 = vsyncpa [#allocation3], 0
    // Predicated region
    $region2: #{tpu_custom_call.1} parent=1 // pred_check
      _
    $region3: #{tpu_custom_call.1} parent=1 // pred_check_branch
      %14 = sbr.rel (0) target = $region5
    $region4: #{tpu_custom_call.1} parent=1 // pred_region
      _
    $region5: #{tpu_custom_call.1} parent=1 // pred_fallthru
      _
    // Predicated region
    $region6: #{tpu_custom_call.1} parent=1 // pred_check
      _
    $region7: #{tpu_custom_call.1} parent=1 // pred_check_branch
      %16 = sbr.rel (0) target = $region9
    $region8: #{tpu_custom_call.1} parent=1 // pred_region
      _
    $region9: #{tpu_custom_call.1} parent=1 // pred_fallthru
      _
    // Predicated region
    $region10: #{tpu_custom_call.1} parent=1 // pred_check
      _
    $region11: #{tpu_custom_call.1} parent=1 // pred_check_branch
      %18 = sbr.rel (0) target = $region13
    $region12: #{tpu_custom_call.1} parent=1 // pred_region
      _
    $region13: #{tpu_custom_call.1} parent=1 // pred_fallthru
      _
    // Predicated region
    $region14: #{tpu_custom_call.1} parent=1 // pred_check
      _
    $region15: #{tpu_custom_call.1} parent=1 // pred_check_branch
      %20 = sbr.rel (0) target = $region17
    $region16: #{tpu_custom_call.1} parent=1 // pred_region
      _
    $region17: #{tpu_custom_call.1} parent=1 // pred_fallthru
      _
    // Predicated region
    $region18: #{tpu_custom_call.1} parent=1 // pred_check
      _
    $region19: #{tpu_custom_call.1} parent=1 // pred_check_branch
      %22 = sbr.rel (0) target = $region21
    $region20: #{tpu_custom_call.1} parent=1 // pred_region
      _
    $region21: #{tpu_custom_call.1} parent=1 // pred_fallthru
      _
    // Predicated region
    $region22: #{tpu_custom_call.1} parent=1 // pred_check
      _
    $region23: #{tpu_custom_call.1} parent=1 // pred_check_branch
      %24 = sbr.rel (0) target = $region25
    $region24: #{tpu_custom_call.1} parent=1 // pred_region
      _
    $region25: #{tpu_custom_call.1} parent=1 // pred_fallthru
      _
    // Predicated region
    $region26: #{tpu_custom_call.1} parent=1 // pred_check
      _
    $region27: #{tpu_custom_call.1} parent=1 // pred_check_branch
      %26 = sbr.rel (0) target = $region29
    $region28: #{tpu_custom_call.1} parent=1 // pred_region
      _
    $region29: #{tpu_custom_call.1} parent=1 // pred_fallthru
      _
    %v27 = vld [vmem:[%s1] sm:$0xff]
    %v28 = vld [vmem:[%s3] sm:$0xff]
    %v29 = vld [vmem:[%s2] sm:$0xff]
    %31 = vset.pattern.permute.xlu0 0
    %32 = vperm.xlu0 %31, %v29
    %v33 = vpop.permute.xlu0 %32
    %v35 = vld [vmem:[%s4] sm:$0xff]
    %37 = vset.pattern.permute.xlu0 0
    %38 = vperm.xlu0 %37, %v35
    %v39 = vpop.permute.xlu0 %38
    %v41 = vld [vmem:[%s5] sm:$0xff]
    %v42 = vld [vmem:[%s6] sm:$0xff]
    %44 = vset.pattern.permute.xlu0 0
    %45 = vperm.xlu0 %44, %v42
    %v46 = vpop.permute.xlu0 %45
    %v48 = vld [vmem:[%s0] sm:$0xf]
    %v49 = vlaneseq
    %v50 = vand.u32 %v49, 127
    %vm51 = vcmask 1047680
    %52 = vrot.lane.b32.xlu0 %v48, 16
    %v53 = vpop.permute.xlu0 %52
    %v54 = vsel %vm51, %v53, %v48
    %55 = vrot.lane.b32.xlu0 %v54, 16
    %v56 = vpop.permute.xlu0 %55
    %v57 = vsel %vm51, %v56, %v48
    %vm58 = vcmp.lt.s32.totalorder %v50, 4
    %60 = vrot.lane.b32.xlu0 %v57, 116
    %v61 = vpop.permute.xlu0 %60
    %v63 = vsel %vm58, 0.0, %v61
    %vm64 = vcmp.lt.s32.totalorder %v50, 2
    %65 = vrot.lane.b32.xlu0 %v57, 114
    %v66 = vpop.permute.xlu0 %65
    %v68 = vsel %vm64, 0.0, %v66
    %v70 = vrot.slane %v68, 4
    %vm72 = vcmask 1043456
    %v73 = vsel %vm72, %v63, %v70
    %vm74 = vcmask 97280
    %v76 = vsel %vm74, %v27, 0
    %v79 = vsel %vm72, %v48, 0
    %81 = vmatprep.subr.mxu0 0.0
    %82 = vmatpush1.msra.mxu0 %v73
    %83 = vmatprep.subr.mxu0 0.0
    %84 = vmatpush1.msra.mxu0 %v79
    %85 = vmatprep.subr.mxu0 0.0
    %86 = vmatpush1.msra.mxu0 0.0
    %87 = vmatprep.subr.mxu0 0.0
    %88 = vmatpush1.msra.mxu0 0.0
    %89 = vmatprep.subr.mxu0 0.0
    %90 = vmatpush1.msra.mxu0 0.0
    %91 = vmatprep.subr.mxu0 0.0
    %92 = vmatpush1.msra.mxu0 0.0
    %93 = vmatprep.subr.mxu0 0.0
    %94 = vmatpush1.msra.mxu0 0.0
    %95 = vmatprep.subr.mxu0 0.0
    %96 = vmatpush1.msra.mxu0 0.0
    %97 = vmatprep.subr.mxu0 0.0
    %98 = vmatpush1.msra.mxu0 0.0
    %99 = vmatprep.subr.mxu0 0.0
    %100 = vmatpush1.msra.mxu0 0.0
    %101 = vmatprep.subr.mxu0 0.0
    %102 = vmatpush1.msra.mxu0 0.0
    %103 = vmatprep.subr.mxu0 0.0
    %104 = vmatpush1.msra.mxu0 0.0
    %105 = vmatprep.subr.mxu0 0.0
    %106 = vmatpush1.msra.mxu0 0.0
    %107 = vmatprep.subr.mxu0 0.0
    %108 = vmatpush1.msra.mxu0 0.0
    %109 = vmatprep.subr.mxu0 0.0
    %110 = vmatpush1.msra.mxu0 0.0
    %111 = vmatprep.subr.mxu0 0.0
    %112 = vmatpush1.msra.mxu0 0.0
    %113 = vmatprep.subr.mxu0 0.0
    %114 = vmatpush1.msra.mxu0 0.0
    %115 = vmatprep.subr.mxu0 0.0
    %116 = vmatpush1.msra.mxu0 0.0
    %117 = vmatprep.subr.mxu0 0.0
    %118 = vmatpush1.msra.mxu0 0.0
    %119 = vmatprep.subr.mxu0 0.0
    %120 = vmatpush1.msra.mxu0 0.0
    %121 = vmatprep.subr.mxu0 0.0
    %122 = vmatpush1.msra.mxu0 0.0
    %123 = vmatprep.subr.mxu0 0.0
    %124 = vmatpush1.msra.mxu0 0.0
    %125 = vmatprep.subr.mxu0 0.0
    %126 = vmatpush1.msra.mxu0 0.0
    %127 = vmatprep.subr.mxu0 0.0
    %128 = vmatpush1.msra.mxu0 0.0
    %129 = vmatprep.subr.mxu0 0.0
    %130 = vmatpush1.msra.mxu0 0.0
    %131 = vmatprep.subr.mxu0 0.0
    %132 = vmatpush1.msra.mxu0 0.0
    %133 = vmatprep.subr.mxu0 0.0
    %134 = vmatpush1.msra.mxu0 0.0
    %135 = vmatprep.subr.mxu0 0.0
    %136 = vmatpush1.msra.mxu0 0.0
    %137 = vmatprep.subr.mxu0 0.0
    %138 = vmatpush1.msra.mxu0 0.0
    %139 = vmatprep.subr.mxu0 0.0
    %140 = vmatpush1.msra.mxu0 0.0
    %141 = vmatprep.subr.mxu0 0.0
    %142 = vmatpush1.msra.mxu0 0.0
    %143 = vmatprep.subr.mxu0 0.0
    %144 = vmatpush1.msra.mxu0 0.0
    %145 = vmatprep.mubr.f32.mxu0 0.0
    %146 = vmatmul.mubr.f32.gmra.mrb[0].mxu0 %v76
    %v147 = vpop.f32.mrb[0].mxu0
    %v148 = vadd.f32 %v33, %v147
    %v149 = vpop.f32.mrb[0].mxu0
    %150 = vdwg.mxu0
    %v151 = vmax.f32 %v148, 0.0
    %152 = vrot.lane.b32.xlu0 %v151, 16
    %v153 = vpop.permute.xlu0 %152
    %v154 = vsel %vm51, %v153, %v151
    %155 = vrot.lane.b32.xlu0 %v154, 16
    %v156 = vpop.permute.xlu0 %155
    %v157 = vsel %vm51, %v156, %v151
    %159 = vrot.lane.b32.xlu0 %v157, 116
    %v160 = vpop.permute.xlu0 %159
    %v162 = vsel %vm58, 0.0, %v160
    %163 = vrot.lane.b32.xlu0 %v157, 114
    %v164 = vpop.permute.xlu0 %163
    %v166 = vsel %vm64, 0.0, %v164
    %vm167 = vcmask 195584
    %v169 = vsel %vm167, %v28, 0
    %171 = vmatprep.subr.mxu0 0.0
    %172 = vmatpush1.msra.mxu0 %v162
    %173 = vmatprep.subr.mxu0 0.0
    %174 = vmatpush1.msra.mxu0 %v166
    %175 = vmatprep.subr.mxu0 0.0
    %176 = vmatpush1.msra.mxu0 %v151
    %177 = vmatprep.subr.mxu0 0.0
    %178 = vmatpush1.msra.mxu0 0.0
    %179 = vmatprep.subr.mxu0 0.0
    %180 = vmatpush1.msra.mxu0 0.0
    %181 = vmatprep.subr.mxu0 0.0
    %182 = vmatpush1.msra.mxu0 0.0
    %183 = vmatprep.subr.mxu0 0.0
    %184 = vmatpush1.msra.mxu0 0.0
    %185 = vmatprep.subr.mxu0 0.0
    %186 = vmatpush1.msra.mxu0 0.0
    %187 = vmatprep.subr.mxu0 0.0
    %188 = vmatpush1.msra.mxu0 0.0
    %189 = vmatprep.subr.mxu0 0.0
    %190 = vmatpush1.msra.mxu0 0.0
    %191 = vmatprep.subr.mxu0 0.0
    %192 = vmatpush1.msra.mxu0 0.0
    %193 = vmatprep.subr.mxu0 0.0
    %194 = vmatpush1.msra.mxu0 0.0
    %195 = vmatprep.subr.mxu0 0.0
    %196 = vmatpush1.msra.mxu0 0.0
    %197 = vmatprep.subr.mxu0 0.0
    %198 = vmatpush1.msra.mxu0 0.0
    %199 = vmatprep.subr.mxu0 0.0
    %200 = vmatpush1.msra.mxu0 0.0
    %201 = vmatprep.subr.mxu0 0.0
    %202 = vmatpush1.msra.mxu0 0.0
    %203 = vmatprep.subr.mxu0 0.0
    %204 = vmatpush1.msra.mxu0 0.0
    %205 = vmatprep.subr.mxu0 0.0
    %206 = vmatpush1.msra.mxu0 0.0
    %207 = vmatprep.subr.mxu0 0.0
    %208 = vmatpush1.msra.mxu0 0.0
    %209 = vmatprep.subr.mxu0 0.0
    %210 = vmatpush1.msra.mxu0 0.0
    %211 = vmatprep.subr.mxu0 0.0
    %212 = vmatpush1.msra.mxu0 0.0
    %213 = vmatprep.subr.mxu0 0.0
    %214 = vmatpush1.msra.mxu0 0.0
    %215 = vmatprep.subr.mxu0 0.0
    %216 = vmatpush1.msra.mxu0 0.0
    %217 = vmatprep.subr.mxu0 0.0
    %218 = vmatpush1.msra.mxu0 0.0
    %219 = vmatprep.subr.mxu0 0.0
    %220 = vmatpush1.msra.mxu0 0.0
    %221 = vmatprep.subr.mxu0 0.0
    %222 = vmatpush1.msra.mxu0 0.0
    %223 = vmatprep.subr.mxu0 0.0
    %224 = vmatpush1.msra.mxu0 0.0
    %225 = vmatprep.subr.mxu0 0.0
    %226 = vmatpush1.msra.mxu0 0.0
    %227 = vmatprep.subr.mxu0 0.0
    %228 = vmatpush1.msra.mxu0 0.0
    %229 = vmatprep.subr.mxu0 0.0
    %230 = vmatpush1.msra.mxu0 0.0
    %231 = vmatprep.subr.mxu0 0.0
    %232 = vmatpush1.msra.mxu0 0.0
    %233 = vmatprep.subr.mxu0 0.0
    %234 = vmatpush1.msra.mxu0 0.0
    %235 = vmatprep.mubr.f32.mxu0 0.0
    %236 = vmatmul.mubr.f32.gmra.mrb[0].mxu0 %v169
    %v237 = vpop.f32.mrb[0].mxu0
    %v238 = vadd.f32 %v39, %v237
    %v239 = vpop.f32.mrb[0].mxu0
    %240 = vdwg.mxu0
    %v241 = vmax.f32 %v238, 0.0
    %vm242 = vcmask 31744
    %v244 = vsel %vm242, %v41, 0
    %246 = vmatprep.subr.mxu0 0.0
    %247 = vmatpush1.msra.mxu0 %v79
    %248 = vmatprep.subr.mxu0 0.0
    %249 = vmatpush1.msra.mxu0 0.0
    %250 = vmatprep.subr.mxu0 0.0
    %251 = vmatpush1.msra.mxu0 0.0
    %252 = vmatprep.subr.mxu0 0.0
    %253 = vmatpush1.msra.mxu0 0.0
    %254 = vmatprep.subr.mxu0 0.0
    %255 = vmatpush1.msra.mxu0 0.0
    %256 = vmatprep.subr.mxu0 0.0
    %257 = vmatpush1.msra.mxu0 0.0
    %258 = vmatprep.subr.mxu0 0.0
    %259 = vmatpush1.msra.mxu0 0.0
    %260 = vmatprep.subr.mxu0 0.0
    %261 = vmatpush1.msra.mxu0 0.0
    %262 = vmatprep.subr.mxu0 0.0
    %263 = vmatpush1.msra.mxu0 0.0
    %264 = vmatprep.subr.mxu0 0.0
    %265 = vmatpush1.msra.mxu0 0.0
    %266 = vmatprep.subr.mxu0 0.0
    %267 = vmatpush1.msra.mxu0 0.0
    %268 = vmatprep.subr.mxu0 0.0
    %269 = vmatpush1.msra.mxu0 0.0
    %270 = vmatprep.subr.mxu0 0.0
    %271 = vmatpush1.msra.mxu0 0.0
    %272 = vmatprep.subr.mxu0 0.0
    %273 = vmatpush1.msra.mxu0 0.0
    %274 = vmatprep.subr.mxu0 0.0
    %275 = vmatpush1.msra.mxu0 0.0
    %276 = vmatprep.subr.mxu0 0.0
    %277 = vmatpush1.msra.mxu0 0.0
    %278 = vmatprep.subr.mxu0 0.0
    %279 = vmatpush1.msra.mxu0 0.0
    %280 = vmatprep.subr.mxu0 0.0
    %281 = vmatpush1.msra.mxu0 0.0
    %282 = vmatprep.subr.mxu0 0.0
    %283 = vmatpush1.msra.mxu0 0.0
    %284 = vmatprep.subr.mxu0 0.0
    %285 = vmatpush1.msra.mxu0 0.0
    %286 = vmatprep.subr.mxu0 0.0
    %287 = vmatpush1.msra.mxu0 0.0
    %288 = vmatprep.subr.mxu0 0.0
    %289 = vmatpush1.msra.mxu0 0.0
    %290 = vmatprep.subr.mxu0 0.0
    %291 = vmatpush1.msra.mxu0 0.0
    %292 = vmatprep.subr.mxu0 0.0
    %293 = vmatpush1.msra.mxu0 0.0
    %294 = vmatprep.subr.mxu0 0.0
    %295 = vmatpush1.msra.mxu0 0.0
    %296 = vmatprep.subr.mxu0 0.0
    %297 = vmatpush1.msra.mxu0 0.0
    %298 = vmatprep.subr.mxu0 0.0
    %299 = vmatpush1.msra.mxu0 0.0
    %300 = vmatprep.subr.mxu0 0.0
    %301 = vmatpush1.msra.mxu0 0.0
    %302 = vmatprep.subr.mxu0 0.0
    %303 = vmatpush1.msra.mxu0 0.0
    %304 = vmatprep.subr.mxu0 0.0
    %305 = vmatpush1.msra.mxu0 0.0
    %306 = vmatprep.subr.mxu0 0.0
    %307 = vmatpush1.msra.mxu0 0.0
    %308 = vmatprep.subr.mxu0 0.0
    %309 = vmatpush1.msra.mxu0 0.0
    %310 = vmatprep.mubr.f32.mxu0 0.0
    %311 = vmatmul.mubr.f32.gmra.mrb[0].mxu0 %v244
    %v312 = vpop.f32.mrb[0].mxu0
    %v313 = vadd.f32 %v46, %v312
    %v314 = vpop.f32.mrb[0].mxu0
    %315 = vdwg.mxu0
    %v316 = vadd.f32 %v241, %v313
    %v317 = vmax.f32 %v316, 0.0
    %vm318 = vcmask 130048
    %319 = vst.msk [vmem:[#allocation2] sm:$0xff] %vm318, %v317
    %s320 = scalar_lea.vmem %s0, 4
    %v321 = vld [vmem:[%s320] sm:$0xf]
    %322 = vrot.lane.b32.xlu0 %v321, 16
    %v323 = vpop.permute.xlu0 %322
    %v324 = vsel %vm51, %v323, %v321
    %325 = vrot.lane.b32.xlu0 %v324, 16
    %v326 = vpop.permute.xlu0 %325
    %v327 = vsel %vm51, %v326, %v321
    %329 = vrot.lane.b32.xlu0 %v327, 116
    %v330 = vpop.permute.xlu0 %329
    %v332 = vsel %vm58, 0.0, %v330
    %333 = vrot.lane.b32.xlu0 %v327, 114
    %v334 = vpop.permute.xlu0 %333
    %v336 = vsel %vm64, 0.0, %v334
    %v338 = vrot.slane %v336, 4
    %v340 = vsel %vm72, %v332, %v338
    %v342 = vsel %vm72, %v321, 0
    %344 = vmatprep.subr.mxu0 0.0
    %345 = vmatpush1.msra.mxu0 %v340
    %346 = vmatprep.subr.mxu0 0.0
    %347 = vmatpush1.msra.mxu0 %v342
    %348 = vmatprep.subr.mxu0 0.0
    %349 = vmatpush1.msra.mxu0 0.0
    %350 = vmatprep.subr.mxu0 0.0
    %351 = vmatpush1.msra.mxu0 0.0
    %352 = vmatprep.subr.mxu0 0.0
    %353 = vmatpush1.msra.mxu0 0.0
    %354 = vmatprep.subr.mxu0 0.0
    %355 = vmatpush1.msra.mxu0 0.0
    %356 = vmatprep.subr.mxu0 0.0
    %357 = vmatpush1.msra.mxu0 0.0
    %358 = vmatprep.subr.mxu0 0.0
    %359 = vmatpush1.msra.mxu0 0.0
    %360 = vmatprep.subr.mxu0 0.0
    %361 = vmatpush1.msra.mxu0 0.0
    %362 = vmatprep.subr.mxu0 0.0
    %363 = vmatpush1.msra.mxu0 0.0
    %364 = vmatprep.subr.mxu0 0.0
    %365 = vmatpush1.msra.mxu0 0.0
    %366 = vmatprep.subr.mxu0 0.0
    %367 = vmatpush1.msra.mxu0 0.0
    %368 = vmatprep.subr.mxu0 0.0
    %369 = vmatpush1.msra.mxu0 0.0
    %370 = vmatprep.subr.mxu0 0.0
    %371 = vmatpush1.msra.mxu0 0.0
    %372 = vmatprep.subr.mxu0 0.0
    %373 = vmatpush1.msra.mxu0 0.0
    %374 = vmatprep.subr.mxu0 0.0
    %375 = vmatpush1.msra.mxu0 0.0
    %376 = vmatprep.subr.mxu0 0.0
    %377 = vmatpush1.msra.mxu0 0.0
    %378 = vmatprep.subr.mxu0 0.0
    %379 = vmatpush1.msra.mxu0 0.0
    %380 = vmatprep.subr.mxu0 0.0
    %381 = vmatpush1.msra.mxu0 0.0
    %382 = vmatprep.subr.mxu0 0.0
    %383 = vmatpush1.msra.mxu0 0.0
    %384 = vmatprep.subr.mxu0 0.0
    %385 = vmatpush1.msra.mxu0 0.0
    %386 = vmatprep.subr.mxu0 0.0
    %387 = vmatpush1.msra.mxu0 0.0
    %388 = vmatprep.subr.mxu0 0.0
    %389 = vmatpush1.msra.mxu0 0.0
    %390 = vmatprep.subr.mxu0 0.0
    %391 = vmatpush1.msra.mxu0 0.0
    %392 = vmatprep.subr.mxu0 0.0
    %393 = vmatpush1.msra.mxu0 0.0
    %394 = vmatprep.subr.mxu0 0.0
    %395 = vmatpush1.msra.mxu0 0.0
    %396 = vmatprep.subr.mxu0 0.0
    %397 = vmatpush1.msra.mxu0 0.0
    %398 = vmatprep.subr.mxu0 0.0
    %399 = vmatpush1.msra.mxu0 0.0
    %400 = vmatprep.subr.mxu0 0.0
    %401 = vmatpush1.msra.mxu0 0.0
    %402 = vmatprep.subr.mxu0 0.0
    %403 = vmatpush1.msra.mxu0 0.0
    %404 = vmatprep.subr.mxu0 0.0
    %405 = vmatpush1.msra.mxu0 0.0
    %406 = vmatprep.subr.mxu0 0.0
    %407 = vmatpush1.msra.mxu0 0.0
    %408 = vmatprep.mubr.f32.mxu0 0.0
    %409 = vmatmul.mubr.f32.gmra.mrb[0].mxu0 %v76
    %v410 = vpop.f32.mrb[0].mxu0
    %v411 = vadd.f32 %v33, %v410
    %v412 = vpop.f32.mrb[0].mxu0
    %413 = vdwg.mxu0
    %v414 = vmax.f32 %v411, 0.0
    %415 = vrot.lane.b32.xlu0 %v414, 16
    %v416 = vpop.permute.xlu0 %415
    %v417 = vsel %vm51, %v416, %v414
    %418 = vrot.lane.b32.xlu0 %v417, 16
    %v419 = vpop.permute.xlu0 %418
    %v420 = vsel %vm51, %v419, %v414
    %422 = vrot.lane.b32.xlu0 %v420, 116
    %v423 = vpop.permute.xlu0 %422
    %v425 = vsel %vm58, 0.0, %v423
    %426 = vrot.lane.b32.xlu0 %v420, 114
    %v427 = vpop.permute.xlu0 %426
    %v429 = vsel %vm64, 0.0, %v427
    %430 = vmatprep.subr.mxu0 0.0
    %431 = vmatpush1.msra.mxu0 %v425
    %432 = vmatprep.subr.mxu0 0.0
    %433 = vmatpush1.msra.mxu0 %v429
    %434 = vmatprep.subr.mxu0 0.0
    %435 = vmatpush1.msra.mxu0 %v414
    %436 = vmatprep.subr.mxu0 0.0
    %437 = vmatpush1.msra.mxu0 0.0
    %438 = vmatprep.subr.mxu0 0.0
    %439 = vmatpush1.msra.mxu0 0.0
    %440 = vmatprep.subr.mxu0 0.0
    %441 = vmatpush1.msra.mxu0 0.0
    %442 = vmatprep.subr.mxu0 0.0
    %443 = vmatpush1.msra.mxu0 0.0
    %444 = vmatprep.subr.mxu0 0.0
    %445 = vmatpush1.msra.mxu0 0.0
    %446 = vmatprep.subr.mxu0 0.0
    %447 = vmatpush1.msra.mxu0 0.0
    %448 = vmatprep.subr.mxu0 0.0
    %449 = vmatpush1.msra.mxu0 0.0
    %450 = vmatprep.subr.mxu0 0.0
    %451 = vmatpush1.msra.mxu0 0.0
    %452 = vmatprep.subr.mxu0 0.0
    %453 = vmatpush1.msra.mxu0 0.0
    %454 = vmatprep.subr.mxu0 0.0
    %455 = vmatpush1.msra.mxu0 0.0
    %456 = vmatprep.subr.mxu0 0.0
    %457 = vmatpush1.msra.mxu0 0.0
    %458 = vmatprep.subr.mxu0 0.0
    %459 = vmatpush1.msra.mxu0 0.0
    %460 = vmatprep.subr.mxu0 0.0
    %461 = vmatpush1.msra.mxu0 0.0
    %462 = vmatprep.subr.mxu0 0.0
    %463 = vmatpush1.msra.mxu0 0.0
    %464 = vmatprep.subr.mxu0 0.0
    %465 = vmatpush1.msra.mxu0 0.0
    %466 = vmatprep.subr.mxu0 0.0
    %467 = vmatpush1.msra.mxu0 0.0
    %468 = vmatprep.subr.mxu0 0.0
    %469 = vmatpush1.msra.mxu0 0.0
    %470 = vmatprep.subr.mxu0 0.0
    %471 = vmatpush1.msra.mxu0 0.0
    %472 = vmatprep.subr.mxu0 0.0
    %473 = vmatpush1.msra.mxu0 0.0
    %474 = vmatprep.subr.mxu0 0.0
    %475 = vmatpush1.msra.mxu0 0.0
    %476 = vmatprep.subr.mxu0 0.0
    %477 = vmatpush1.msra.mxu0 0.0
    %478 = vmatprep.subr.mxu0 0.0
    %479 = vmatpush1.msra.mxu0 0.0
    %480 = vmatprep.subr.mxu0 0.0
    %481 = vmatpush1.msra.mxu0 0.0
    %482 = vmatprep.subr.mxu0 0.0
    %483 = vmatpush1.msra.mxu0 0.0
    %484 = vmatprep.subr.mxu0 0.0
    %485 = vmatpush1.msra.mxu0 0.0
    %486 = vmatprep.subr.mxu0 0.0
    %487 = vmatpush1.msra.mxu0 0.0
    %488 = vmatprep.subr.mxu0 0.0
    %489 = vmatpush1.msra.mxu0 0.0
    %490 = vmatprep.subr.mxu0 0.0
    %491 = vmatpush1.msra.mxu0 0.0
    %492 = vmatprep.subr.mxu0 0.0
    %493 = vmatpush1.msra.mxu0 0.0
    %494 = vmatprep.mubr.f32.mxu0 0.0
    %495 = vmatmul.mubr.f32.gmra.mrb[0].mxu0 %v169
    %v496 = vpop.f32.mrb[0].mxu0
    %v497 = vadd.f32 %v39, %v496
    %v498 = vpop.f32.mrb[0].mxu0
    %499 = vdwg.mxu0
    %v500 = vmax.f32 %v497, 0.0
    %501 = vmatprep.subr.mxu0 0.0
    %502 = vmatpush1.msra.mxu0 %v342
    %503 = vmatprep.subr.mxu0 0.0
    %504 = vmatpush1.msra.mxu0 0.0
    %505 = vmatprep.subr.mxu0 0.0
    %506 = vmatpush1.msra.mxu0 0.0
    %507 = vmatprep.subr.mxu0 0.0
    %508 = vmatpush1.msra.mxu0 0.0
    %509 = vmatprep.subr.mxu0 0.0
    %510 = vmatpush1.msra.mxu0 0.0
    %511 = vmatprep.subr.mxu0 0.0
    %512 = vmatpush1.msra.mxu0 0.0
    %513 = vmatprep.subr.mxu0 0.0
    %514 = vmatpush1.msra.mxu0 0.0
    %515 = vmatprep.subr.mxu0 0.0
    %516 = vmatpush1.msra.mxu0 0.0
    %517 = vmatprep.subr.mxu0 0.0
    %518 = vmatpush1.msra.mxu0 0.0
    %519 = vmatprep.subr.mxu0 0.0
    %520 = vmatpush1.msra.mxu0 0.0
    %521 = vmatprep.subr.mxu0 0.0
    %522 = vmatpush1.msra.mxu0 0.0
    %523 = vmatprep.subr.mxu0 0.0
    %524 = vmatpush1.msra.mxu0 0.0
    %525 = vmatprep.subr.mxu0 0.0
    %526 = vmatpush1.msra.mxu0 0.0
    %527 = vmatprep.subr.mxu0 0.0
    %528 = vmatpush1.msra.mxu0 0.0
    %529 = vmatprep.subr.mxu0 0.0
    %530 = vmatpush1.msra.mxu0 0.0
    %531 = vmatprep.subr.mxu0 0.0
    %532 = vmatpush1.msra.mxu0 0.0
    %533 = vmatprep.subr.mxu0 0.0
    %534 = vmatpush1.msra.mxu0 0.0
    %535 = vmatprep.subr.mxu0 0.0
    %536 = vmatpush1.msra.mxu0 0.0
    %537 = vmatprep.subr.mxu0 0.0
    %538 = vmatpush1.msra.mxu0 0.0
    %539 = vmatprep.subr.mxu0 0.0
    %540 = vmatpush1.msra.mxu0 0.0
    %541 = vmatprep.subr.mxu0 0.0
    %542 = vmatpush1.msra.mxu0 0.0
    %543 = vmatprep.subr.mxu0 0.0
    %544 = vmatpush1.msra.mxu0 0.0
    %545 = vmatprep.subr.mxu0 0.0
    %546 = vmatpush1.msra.mxu0 0.0
    %547 = vmatprep.subr.mxu0 0.0
    %548 = vmatpush1.msra.mxu0 0.0
    %549 = vmatprep.subr.mxu0 0.0
    %550 = vmatpush1.msra.mxu0 0.0
    %551 = vmatprep.subr.mxu0 0.0
    %552 = vmatpush1.msra.mxu0 0.0
    %553 = vmatprep.subr.mxu0 0.0
    %554 = vmatpush1.msra.mxu0 0.0
    %555 = vmatprep.subr.mxu0 0.0
    %556 = vmatpush1.msra.mxu0 0.0
    %557 = vmatprep.subr.mxu0 0.0
    %558 = vmatpush1.msra.mxu0 0.0
    %559 = vmatprep.subr.mxu0 0.0
    %560 = vmatpush1.msra.mxu0 0.0
    %561 = vmatprep.subr.mxu0 0.0
    %562 = vmatpush1.msra.mxu0 0.0
    %563 = vmatprep.subr.mxu0 0.0
    %564 = vmatpush1.msra.mxu0 0.0
    %565 = vmatprep.mubr.f32.mxu0 0.0
    %566 = vmatmul.mubr.f32.gmra.mrb[0].mxu0 %v244
    %v567 = vpop.f32.mrb[0].mxu0
    %v568 = vadd.f32 %v46, %v567
    %v569 = vpop.f32.mrb[0].mxu0
    %570 = vdwg.mxu0
    %v571 = vadd.f32 %v500, %v568
    %v572 = vmax.f32 %v571, 0.0
    %s573 = scalar_lea.vmem [#allocation2], 8
    %574 = vst.msk [vmem:[%s573] sm:$0xff] %vm318, %v572
    // Predicated region
    $region30: #{tpu_custom_call.1} parent=1 // pred_check
      _
    $region31: #{tpu_custom_call.1} parent=1 // pred_check_branch
      %576 = sbr.rel (0) target = $region33
    $region32: #{tpu_custom_call.1} parent=1 // pred_region
      %s578 = ssub.s32 256, 256
      %579 = vsyncadd [#allocation3], %s578
      %s580 = sshll.u32 [#allocation2], 4
      %s581 = int_to_ptr.vmem [resolvable:$true] %s580
      %586 = dma.vmem_to_hbm [thread:$0]  %s581, 256, %s7, [#allocation3], 128, 128, 8
    $region33: #{tpu_custom_call.1} parent=1 // pred_fallthru
      _
    // Predicated region
    $region34: #{tpu_custom_call.1} parent=1 // pred_check
      _
    $region35: #{tpu_custom_call.1} parent=1 // pred_check_branch
      %588 = sbr.rel (0) target = $region37
    $region36: #{tpu_custom_call.1} parent=1 // pred_region
      %589 = dma.done [#allocation3], 256
    $region37: #{tpu_custom_call.1} parent=1 // pred_fallthru
      _
    %590 = vsyncpa [#allocation3], 1

</llo_original>
